<compile_context>
chip_gen: v5e
topology: v5e:2x2
jax: 0.10.0
libtpu: 0.0.40
codegen_flags: <defaults>
</compile_context>

<pallas_src>
import functools

import jax
import jax.numpy as jnp
from jax.experimental import pallas as pl
from jax.experimental.pallas import tpu as pltpu

# Static hyper-parameters (match PyTorch defaults).
BETA = 0.1
LAMDA = 1.0
ALPHASCALE = 1000.0

# Number of row-range chunks exposed on the leading "parallel" grid axis.
# Matches v7x's 2 TensorCores; on v5e/v6e (1 TC) it is just an outer loop.
NUM_CHUNKS = 2


def _round_up(x, m):
    return ((x + m - 1) // m) * m


def _cdiv(a, b):
    return -(-a // b)


def _vmem_cap_bytes():
    """Physical VMEM capacity for the current generation (fallback 64 MiB)."""
    try:
        return int(pltpu.get_tpu_info().vmem_capacity_bytes)
    except Exception:  # pragma: no cover - conservative fallback (v7x per-TC)
        return 64 * 1024 * 1024


def _tail_kernel(alpha_ref, x_ref, w_ref, b_ref, out_ref, acc_ref, *,
                 n_rows, tm, n_tiles, tiles_per_chunk, need_mask, has_oob,
                 use_bf16):
    """One grid step: (tm, D) row-tile of X -> fold relu(loss - alpha) by
    row-groups of 8 into an (8, D) f32 VMEM accumulator; each chunk reduces
    to its own partial-sum output block on its last step."""
    c = pl.program_id(0)                       # chunk (parallel axis)
    i = pl.program_id(1)                       # row-tile within chunk
    t = c * tiles_per_chunk + i                # global row-tile index

    @pl.when(i == 0)
    def _init():
        acc_ref[...] = jnp.zeros_like(acc_ref)

    def _step():
        x = x_ref[...]                         # (tm, D), native dtype
        w = w_ref[...]                         # (D, D), native dtype
        b = b_ref[...]                         # (1, D), already f32

        # learner(X): linear reconstruction on the MXU, f32 accumulation.
        if use_bf16:
            pred = jnp.dot(x.astype(jnp.bfloat16), w.astype(jnp.bfloat16),
                           preferred_element_type=jnp.float32)
        else:
            pred = jnp.dot(x, w, preferred_element_type=jnp.float32)
        pred = pred + b

        # l2 loss in f32.
        loss = jnp.square(pred - x.astype(jnp.float32))

        # alpha (already divided by alphascale in the wrapper), from SMEM.
        alpha = alpha_ref[0, 0]

        # Only the relu term is accumulated; `alpha +` and 1/beta are hoisted
        # into the wrapper finalization.
        excess = jnp.maximum(loss - alpha, 0.0)          # (tm, D) f32

        def _fold(vals):
            # Fold rows by groups of 8 (sublane tile) -> (8, D). Pure VPU
            # adds; cuts accumulator store traffic by tm/8 vs a (tm, D) RMW.
            return jnp.sum(vals.reshape(tm // 8, 8, vals.shape[-1]), axis=0)

        if need_mask:
            # Only the globally-last tile can be ragged: gate the mask there.
            @pl.when(t == n_tiles - 1)
            def _masked():
                row_ids = jax.lax.broadcasted_iota(jnp.int32, excess.shape, 0)
                valid = row_ids < (n_rows - t * tm)
                acc_ref[...] += _fold(jnp.where(valid, excess, 0.0))

            @pl.when(t != n_tiles - 1)
            def _plain():
                acc_ref[...] += _fold(excess)
        else:
            acc_ref[...] += _fold(excess)

    if has_oob:
        # Uneven chunking: pad tiles past n_tiles contribute nothing.
        pl.when(t < n_tiles)(_step)
    else:
        _step()

    @pl.when(i == pl.num_programs(1) - 1)
    def _finalize():
        s = jnp.sum(acc_ref[...])
        # Lane/sublane-dense unmasked store of the chunk's partial sum.
        out_ref[...] = jnp.broadcast_to(s, out_ref.shape).astype(out_ref.dtype)


def tail_forward(x, w, b, alpha_param, *, beta=BETA, lamda=LAMDA,
                 alphascale=ALPHASCALE, tm=2048, num_chunks=NUM_CHUNKS,
                 mxu_bf16=False):
    """x: (N, D), w: (D, D), b: (D,), alpha_param: (1,) parameter."""
    N, D = x.shape

    # Row tile: multiple of 8 (f32 sublane), never (much) larger than N.
    tm = _round_up(min(tm, _round_up(N, 8)), 8)
    n_tiles = _cdiv(N, tm)
    need_mask = (N % tm) != 0

    # Split the row-tile range into chunks for the parallel leading axis.
    num_chunks = max(1, min(int(num_chunks), n_tiles))
    tiles_per_chunk = _cdiv(n_tiles, num_chunks)
    has_oob = num_chunks * tiles_per_chunk > n_tiles
    grid = (num_chunks, tiles_per_chunk)

    # Scalar glue (parameter scaling), kept outside the kernel.
    alpha = (alpha_param.astype(jnp.float32) / alphascale)        # (1,)
    alpha_smem = alpha.reshape(1, 1)
    b2d = b.astype(jnp.float32).reshape(1, D)                     # pre-cast

    if has_oob:
        x_index = lambda c, i: (jnp.minimum(c * tiles_per_chunk + i,
                                            n_tiles - 1), 0)
    else:
        x_index = lambda c, i: (c * tiles_per_chunk + i, 0)

    # W is resident (same block every step). For large D, single-buffer it so
    # the double-buffer does not blow v7x's 64 MiB VMEM.
    w_bytes = D * D * w.dtype.itemsize
    if 2 * w_bytes > (8 << 20):
        w_spec = pl.BlockSpec((D, D), lambda c, i: (0, 0),
                              pipeline_mode=pl.Buffered(1))
        w_bufs = 1
    else:
        w_spec = pl.BlockSpec((D, D), lambda c, i: (0, 0))
        w_bufs = 2
    # TODO(synk): for very large D (2*D^2*itemsize near the VMEM budget) also
    # tile W along a K/N grid axis instead of keeping it fully resident.

    kernel = functools.partial(
        _tail_kernel, n_rows=N, tm=tm, n_tiles=n_tiles,
        tiles_per_chunk=tiles_per_chunk, need_mask=need_mask,
        has_oob=has_oob, use_bf16=mxu_bf16)

    # VMEM budget: double-buffered X tile + W (+bias) + (8, D) accumulator.
    vmem_est = (2 * tm * D * x.dtype.itemsize
                + w_bufs * w_bytes
                + 2 * D * 4
                + 8 * D * 4
                + 2 * 8 * 128 * 4
                + (1 << 20))                       # slack
    vmem_cap = _vmem_cap_bytes()
    vmem_limit = int(min(max(vmem_est, 32 * 1024 * 1024),
                         (3 * vmem_cap) // 4))

    cost = pl.CostEstimate(
        flops=2 * N * D * D + 6 * N * D,
        transcendentals=0,
        bytes_accessed=(N * D * x.dtype.itemsize
                        + D * D * w.dtype.itemsize
                        + D * 4
                        + num_chunks * 8 * 128 * 4),
    )

    partials = pl.pallas_call(
        kernel,
        out_shape=jax.ShapeDtypeStruct((num_chunks, 8, 128), jnp.float32),
        grid_spec=pltpu.PrefetchScalarGridSpec(
            num_scalar_prefetch=0,
            grid=grid,
            in_specs=[
                # alpha scalar lives in SMEM.
                pl.BlockSpec((1, 1), lambda c, i: (0, 0),
                             memory_space=pltpu.SMEM),
                # X row tile (chunk-offset + within-chunk tile index).
                pl.BlockSpec((tm, D), x_index),
                # Weight matrix (same block every step -> fetched once).
                w_spec,
                # Bias row (f32).
                pl.BlockSpec((1, D), lambda c, i: (0, 0)),
            ],
            out_specs=pl.BlockSpec((1, 8, 128), lambda c, i: (c, 0, 0)),
            scratch_shapes=[pltpu.VMEM((8, D), jnp.float32)],
        ),
        compiler_params=pltpu.CompilerParams(
            # Chunk axis shards across TensorCores (v7x); row-tile axis is the
            # in-chunk reduction (accumulator + output persist across it).
            dimension_semantics=("parallel", "arbitrary"),
            vmem_limit_bytes=vmem_limit,
        ),
        cost_estimate=cost,
    )(alpha_smem, x, w, b2d)

    # Finalize: mean(alpha + relu/beta) = alpha + sum(relu) / (beta * N * D).
    total = jnp.sum(partials[:, 0, 0])
    tot_loss = lamda * (alpha[0] + total / (beta * N * D))
    return tot_loss


def tail_reference(x, w, b, alpha_param, *, beta=BETA, lamda=LAMDA,
                   alphascale=ALPHASCALE):
    """Pure-JAX reference mirroring the PyTorch forward."""
    pred = x @ w + b[None, :]
    loss = jnp.square(pred - x)
    alpha = alpha_param / alphascale
    tail_opt = alpha + (1.0 / beta) * jnp.maximum(loss - alpha, 0.0)
    return lamda * jnp.mean(tail_opt)


if __name__ == "__main__":
    key = jax.random.PRNGKey(0)
    kx1, kx2, kx3, kw, kb = jax.random.split(key, 5)

    D = 128

    # Deterministic learner parameters (linear D->D learner).
    w = 0.05 * jax.random.normal(kw, (D, D), dtype=jnp.float32)
    b = 0.01 * jax.random.normal(kb, (D,), dtype=jnp.float32)
    # alpha parameter (nn.Parameter; nonzero so the relu threshold is actually
    # exercised: alpha = 50 / 1000 = 0.05).
    alpha_param = jnp.array([50.0], dtype=jnp.float32)

    # Case 1: single tile, N divisible by the clamped row tile (no mask).
    x1 = jax.random.normal(kx1, (512, D), dtype=jnp.float32)
    out1 = jax.block_until_ready(tail_forward(x1, w, b, alpha_param))
    ref1 = tail_reference(x1, w, b, alpha_param)
    assert jnp.allclose(out1, ref1, rtol=2e-5, atol=1e-5), (out1, ref1)

    # Case 2: ragged single tile (last-tile mask path).
    x2 = jax.random.normal(kx2, (300, D), dtype=jnp.float32)
    out2 = jax.block_until_ready(tail_forward(x2, w, b, alpha_param))
    ref2 = tail_reference(x2, w, b, alpha_param)
    assert jnp.allclose(out2, ref2, rtol=2e-5, atol=1e-5), (out2, ref2)

    # Case 3: small explicit tile -> 2 chunks, ragged last tile + OOB pad tile
    # in the second chunk (exercises the clamp + skip path).
    out3 = jax.block_until_ready(tail_forward(x2, w, b, alpha_param, tm=128))
    assert jnp.allclose(out3, ref2, rtol=2e-5, atol=1e-5), (out3, ref2)

    # Case 4: even multi-chunk split; also exercise the optional bf16 MXU path
    # (looser tolerance vs the f32 reference).
    x4 = jax.random.normal(kx3, (1024, D), dtype=jnp.float32)
    ref4 = tail_reference(x4, w, b, alpha_param)
    out4 = jax.block_until_ready(tail_forward(x4, w, b, alpha_param, tm=256))
    assert jnp.allclose(out4, ref4, rtol=2e-5, atol=1e-5), (out4, ref4)
    out4b = jax.block_until_ready(
        tail_forward(x4, w, b, alpha_param, tm=256, mxu_bf16=True))
    assert jnp.allclose(out4b, ref4, rtol=5e-2, atol=1e-3), (out4b, ref4)

    print("KERNEL_OK")
</pallas_src>

<mosaic_0001>
module attributes {stable_mosaic.version = 11 : i64} {
  func.func @_tail_kernel(%arg0: i32, %arg1: i32, %arg2: memref<1x1xf32, #tpu.memory_space<smem>>, %arg3: memref<512x128xf32, #tpu.memory_space<vmem>>, %arg4: memref<128x128xf32, #tpu.memory_space<vmem>>, %arg5: memref<1x128xf32, #tpu.memory_space<vmem>>, %arg6: memref<1x8x128xf32, #tpu.memory_space<vmem>>, %arg7: memref<8x128xf32, #tpu.memory_space<vmem>>) attributes {dimension_semantics = [#tpu.dimension_semantics<parallel>, #tpu.dimension_semantics<arbitrary>], iteration_bounds = array<i64: 1, 1>, scalar_prefetch = 0 : i64, scratch_operands = 1 : i64, tpu.core_type = #tpu.core_type<tc>, window_params = [{transform_indices = @transform_0, window_bounds = array<i64: 1, 1>}, {transform_indices = @transform_1, window_bounds = array<i64: 512, 128>}, {pipeline_mode = #tpu.pipeline_mode<synchronous>, transform_indices = @transform_2, window_bounds = array<i64: 128, 128>}, {pipeline_mode = #tpu.pipeline_mode<synchronous>, transform_indices = @transform_3, window_bounds = array<i64: 1, 128>}, {transform_indices = @transform_4, window_bounds = array<i64: 1, 8, 128>}]} {
    %c0_i32 = arith.constant 0 : i32
    %0 = arith.cmpi eq, %arg1, %c0_i32 : i32
    %1 = arith.extui %0 : i1 to i32
    %c0_i32_0 = arith.constant 0 : i32
    %2 = arith.cmpi ne, %1, %c0_i32_0 : i32
    scf.if %2 {
      %cst_16 = arith.constant 0.000000e+00 : f32
      %24 = vector.broadcast %cst_16 : f32 to vector<8x128xf32>
      %c0_17 = arith.constant 0 : index
      %c0_18 = arith.constant 0 : index
      %25 = vector.load %arg7[%c0_17, %c0_18] : memref<8x128xf32, #tpu.memory_space<vmem>>, vector<8x128xf32>
      tpu.vector_store %arg7[%c0_17, %c0_18], %24 {strides = array<i32>} : memref<8x128xf32, #tpu.memory_space<vmem>>, vector<8x128xf32>,
    } else {
    }
    %c0 = arith.constant 0 : index
    %c0_1 = arith.constant 0 : index
    %3 = vector.load %arg3[%c0, %c0_1] : memref<512x128xf32, #tpu.memory_space<vmem>>, vector<512x128xf32>
    %c0_2 = arith.constant 0 : index
    %c0_3 = arith.constant 0 : index
    %4 = vector.load %arg4[%c0_2, %c0_3] : memref<128x128xf32, #tpu.memory_space<vmem>>, vector<128x128xf32>
    %c0_4 = arith.constant 0 : index
    %c0_5 = arith.constant 0 : index
    %5 = vector.load %arg5[%c0_4, %c0_5] : memref<1x128xf32, #tpu.memory_space<vmem>>, vector<1x128xf32>
    %cst = arith.constant dense<0.000000e+00> : vector<512x128xf32>
    %6 = tpu.matmul %3, %4, %cst {dimension_numbers = #tpu.dot_dimension_numbers<[1], [0], [0], [1], [0, 0, 1, 1], [], []>} : vector<512x128xf32>, vector<128x128xf32>, vector<512x128xf32> -> vector<512x128xf32>
    %7 = vector.broadcast %5 : vector<1x128xf32> to vector<512x128xf32>
    %8 = arith.addf %6, %7 : vector<512x128xf32>
    %9 = arith.subf %8, %3 : vector<512x128xf32>
    %10 = arith.mulf %9, %9 : vector<512x128xf32>
    %c0_6 = arith.constant 0 : index
    %c0_7 = arith.constant 0 : index
    %11 = memref.load %arg2[%c0_6, %c0_7] : memref<1x1xf32, #tpu.memory_space<smem>>
    %12 = vector.broadcast %11 : f32 to vector<512x128xf32>
    %13 = arith.subf %10, %12 : vector<512x128xf32>
    %cst_8 = arith.constant 0.000000e+00 : f32
    %14 = vector.broadcast %cst_8 : f32 to vector<512x128xf32>
    %15 = arith.maximumf %13, %14 : vector<512x128xf32>
    %c0_9 = arith.constant 0 : index
    %c0_10 = arith.constant 0 : index
    %16 = vector.load %arg7[%c0_9, %c0_10] : memref<8x128xf32, #tpu.memory_space<vmem>>, vector<8x128xf32>
    %17 = vector.shape_cast %15 : vector<512x128xf32> to vector<64x8x128xf32>
    %cst_11 = arith.constant dense<0.000000e+00> : vector<8x128xf32>
    %18 = vector.multi_reduction <add>, %17, %cst_11 [0] : vector<64x8x128xf32> to vector<8x128xf32>
    %19 = arith.addf %16, %18 : vector<8x128xf32>
    %c0_12 = arith.constant 0 : index
    %c0_13 = arith.constant 0 : index
    %20 = vector.load %arg7[%c0_12, %c0_13] : memref<8x128xf32, #tpu.memory_space<vmem>>, vector<8x128xf32>
    tpu.vector_store %arg7[%c0_12, %c0_13], %19 {strides = array<i32>} : memref<8x128xf32, #tpu.memory_space<vmem>>, vector<8x128xf32>,
    %c0_i32_14 = arith.constant 0 : i32
    %21 = arith.cmpi eq, %arg1, %c0_i32_14 : i32
    %22 = arith.extui %21 : i1 to i32
    %c0_i32_15 = arith.constant 0 : i32
    %23 = arith.cmpi ne, %22, %c0_i32_15 : i32
    scf.if %23 {
      %c0_16 = arith.constant 0 : index
      %c0_17 = arith.constant 0 : index
      %24 = vector.load %arg7[%c0_16, %c0_17] : memref<8x128xf32, #tpu.memory_space<vmem>>, vector<8x128xf32>
      %25 = vector.shape_cast %24 : vector<8x128xf32> to vector<1x8x128xf32>
      %cst_18 = arith.constant dense<0.000000e+00> : vector<1xf32>
      %26 = vector.multi_reduction <add>, %25, %cst_18 [1, 2] : vector<1x8x128xf32> to vector<1xf32>
      %27 = vector.shape_cast %26 : vector<1xf32> to vector<1x1x1xf32>
      %28 = vector.extract %27[0, 0, 0] : f32 from vector<1x1x1xf32>
      %29 = vector.broadcast %28 : f32 to vector<1x8x128xf32>
      %c0_19 = arith.constant 0 : index
      %c0_20 = arith.constant 0 : index
      %c0_21 = arith.constant 0 : index
      %30 = vector.load %arg6[%c0_19, %c0_20, %c0_21] : memref<1x8x128xf32, #tpu.memory_space<vmem>>, vector<1x8x128xf32>
      tpu.vector_store %arg6[%c0_19, %c0_20, %c0_21], %29 {strides = array<i32>} : memref<1x8x128xf32, #tpu.memory_space<vmem>>, vector<1x8x128xf32>,
    } else {
    }
    return
  }
  func.func @transform_0(%arg0: i32, %arg1: i32) -> (i32, i32) {
    %c0_i32 = arith.constant 0 : i32
    %c0_i32_0 = arith.constant 0 : i32
    %c0_i32_1 = arith.constant 0 : i32
    return %c0_i32, %c0_i32_0 : i32, i32
  }
  func.func @transform_1(%arg0: i32, %arg1: i32) -> (i32, i32) {
    %c1_i32 = arith.constant 1 : i32
    %0 = arith.muli %arg0, %c1_i32 : i32
    %1 = arith.addi %0, %arg1 : i32
    %c0_i32 = arith.constant 0 : i32
    %c0_i32_0 = arith.constant 0 : i32
    return %1, %c0_i32 : i32, i32
  }
  func.func @transform_2(%arg0: i32, %arg1: i32) -> (i32, i32) {
    %c0_i32 = arith.constant 0 : i32
    %c0_i32_0 = arith.constant 0 : i32
    %c0_i32_1 = arith.constant 0 : i32
    return %c0_i32, %c0_i32_0 : i32, i32
  }
  func.func @transform_3(%arg0: i32, %arg1: i32) -> (i32, i32) {
    %c0_i32 = arith.constant 0 : i32
    %c0_i32_0 = arith.constant 0 : i32
    %c0_i32_1 = arith.constant 0 : i32
    return %c0_i32, %c0_i32_0 : i32, i32
  }
  func.func @transform_4(%arg0: i32, %arg1: i32) -> (i32, i32, i32) {
    %c0_i32 = arith.constant 0 : i32
    %c0_i32_0 = arith.constant 0 : i32
    %c0_i32_1 = arith.constant 0 : i32
    return %arg0, %c0_i32, %c0_i32_0 : i32, i32, i32
  }
}

</mosaic_0001>

<llo_original>
// kernel: tpu_custom_call.1
$region0: #{tpu_custom_call.1}
  #allocation0 [shape = 'u32[]', space=smem, size = 0x4, offset = 0x4, fixed_abs, tag = 'smem constant byte address 0x4 - core index']
  #allocation1 [shape = 'u32[72,128]{1,0:T(1,128)}', space=vmem, size = 0x9000, scoped, tag = 'internal scratch']
  #allocation2 [shape = 'f32[8,128]{1,0:T(8,128)}', space=vmem, size = 0x1000, scoped, tag = 'scratch operand']
  #allocation3 [shape = 'f32[1,1]{1,0:T(1,128)S(6)}', space=smem, size = 0x200, scoped, tag = 'scoped memory for tpu_custom_call.1']
  %s0 = inlined_call_operand.<no memory space> [shape: f32[1,1], index: 0, kind: input, shape index: {}]
  %s1 = inlined_call_operand.hbm [shape: f32[512,128], index: 1, kind: input, shape index: {}]
  %s2 = inlined_call_operand.hbm [shape: f32[128,128], index: 2, kind: input, shape index: {}]
  %s3 = inlined_call_operand.vmem [shape: f32[1,128], index: 3, kind: input, shape index: {}]
  %s4 = inlined_call_operand.hbm [shape: f32[1,8,128], index: 4, kind: output, shape index: {}]
  %s5 = sld [smem:[#allocation0]]
  $region42: #{tpu_custom_call.1} parent=0
    _
  %s7 = ssub.s32 1, %s5
  %s8 = scalar_select 0, %s7, %s5
  %9 = sst [smem:[#allocation3]] %s0
  $region1: #{tpu_custom_call.1} parent=0
    #allocation4 [shape = 'u8[262144]{0}', space=vmem, size = 0x40000, scoped, tag = 'input window, operand 1, single buffered']
    #allocation5 [shape = 's32[1]{0}', space=sflag, size = 0x4, scoped, tag = 'scoped memory for tpu_custom_call.1']
    #allocation6 [shape = 's32[1]{0}', space=sflag, size = 0x4, scoped, tag = 'scoped memory for tpu_custom_call.1']
    #allocation7 [shape = 'u8[65536]{0}', space=vmem, size = 0x10000, scoped, tag = 'input window, operand 2, single buffered']
    #allocation8 [shape = 's32[1]{0}', space=sflag, size = 0x4, scoped, tag = 'scoped memory for tpu_custom_call.1']
    #allocation9 [shape = 'u8[4096]{0}', space=vmem, size = 0x1000, scoped, tag = 'output window, operand 0, single buffered']
    %10 = vsyncpa [#allocation5], 0
    %11 = vsyncpa [#allocation8], 0
    %12 = vsyncpa [#allocation6], 0
    // Predicated region
    $region2: #{tpu_custom_call.1} parent=1 // pred_check
      _
    $region3: #{tpu_custom_call.1} parent=1 // pred_check_branch
      %14 = sbr.rel (0) target = $region5
    $region4: #{tpu_custom_call.1} parent=1 // pred_region
      _
    $region5: #{tpu_custom_call.1} parent=1 // pred_fallthru
      _
    // Predicated region
    $region6: #{tpu_custom_call.1} parent=1 // pred_check
      _
    $region7: #{tpu_custom_call.1} parent=1 // pred_check_branch
      %16 = sbr.rel (0) target = $region9
    $region8: #{tpu_custom_call.1} parent=1 // pred_region
      %s17 = sadd.s32 0, 0
      %s18 = smul.u32 64, %s17
      %20 = vsyncadd [#allocation5], 0
      %s21 = smul.addr %s18, 8
      %s22 = scalar_lea.hbm %s1, %s21
      %s23 = sshll.u32 %s22, 4
      %s24 = int_to_ptr.hbm [resolvable:$true] %s23
      %s25 = sshll.u32 [#allocation4], 4
      %s26 = int_to_ptr.vmem [resolvable:$true] %s25
      %31 = dma.hbm_to_vmem [thread:$0]  %s24, 8192, %s26, [#allocation5], 128, 128, 8
    $region9: #{tpu_custom_call.1} parent=1 // pred_fallthru
      _
    // Predicated region
    $region10: #{tpu_custom_call.1} parent=1 // pred_check
      _
    $region11: #{tpu_custom_call.1} parent=1 // pred_check_branch
      %33 = sbr.rel (0) target = $region13
    $region12: #{tpu_custom_call.1} parent=1 // pred_region
      %35 = vsyncadd [#allocation8], 0
      %s36 = sshll.u32 %s2, 4
      %s37 = int_to_ptr.hbm [resolvable:$true] %s36
      %s38 = sshll.u32 [#allocation7], 4
      %s39 = int_to_ptr.vmem [resolvable:$true] %s38
      %44 = dma.hbm_to_vmem [thread:$0]  %s37, 2048, %s39, [#allocation8], 128, 128, 8
    $region13: #{tpu_custom_call.1} parent=1 // pred_fallthru
      _
    // Predicated region
    $region14: #{tpu_custom_call.1} parent=1 // pred_check
      _
    $region15: #{tpu_custom_call.1} parent=1 // pred_check_branch
      %46 = sbr.rel (0) target = $region17
    $region16: #{tpu_custom_call.1} parent=1 // pred_region
      _
    $region17: #{tpu_custom_call.1} parent=1 // pred_fallthru
      _
    // Predicated region
    $region18: #{tpu_custom_call.1} parent=1 // pred_check
      _
    $region19: #{tpu_custom_call.1} parent=1 // pred_check_branch
      %48 = sbr.rel (0) target = $region21
    $region20: #{tpu_custom_call.1} parent=1 // pred_region
      %50 = dma.done [#allocation5], 8192
    $region21: #{tpu_custom_call.1} parent=1 // pred_fallthru
      _
    // Predicated region
    $region22: #{tpu_custom_call.1} parent=1 // pred_check
      _
    $region23: #{tpu_custom_call.1} parent=1 // pred_check_branch
      %52 = sbr.rel (0) target = $region25
    $region24: #{tpu_custom_call.1} parent=1 // pred_region
      %54 = dma.done [#allocation8], 2048
    $region25: #{tpu_custom_call.1} parent=1 // pred_fallthru
      _
    %s55 = sadd.s32 0, 0
    %s56 = smul.u32 64, %s55
    %p57 = scmp.eq.s32.totalorder 0, 0
    // Predicated region
    $region26: #{tpu_custom_call.1} parent=1 // pred_check
      %p58 = pneg %p57
    $region27: #{tpu_custom_call.1} parent=1 // pred_check_branch
      %60 = sbr.rel (%p58) target = $region29
    $region28: #{tpu_custom_call.1} parent=1 // pred_region
      %61 = vst [vmem:[#allocation2] sm:$0xff] 0.0
    $region29: #{tpu_custom_call.1} parent=1 // pred_fallthru
      _
    %v62 = vld [vmem:[#allocation4] sm:$0xff]
    %v63 = vld [vmem:[#allocation4 + $0x8] sm:$0xff]
    %v64 = vld [vmem:[#allocation4 + $0x10] sm:$0xff]
    %v65 = vld [vmem:[#allocation4 + $0x18] sm:$0xff]
    %v66 = vld [vmem:[#allocation4 + $0x20] sm:$0xff]
    %v67 = vld [vmem:[#allocation4 + $0x28] sm:$0xff]
    %v68 = vld [vmem:[#allocation4 + $0x30] sm:$0xff]
    %v69 = vld [vmem:[#allocation4 + $0x38] sm:$0xff]
    %v70 = vld [vmem:[#allocation4 + $0x40] sm:$0xff]
    %v71 = vld [vmem:[#allocation4 + $0x48] sm:$0xff]
    %v72 = vld [vmem:[#allocation4 + $0x50] sm:$0xff]
    %v73 = vld [vmem:[#allocation4 + $0x58] sm:$0xff]
    %v74 = vld [vmem:[#allocation4 + $0x60] sm:$0xff]
    %v75 = vld [vmem:[#allocation4 + $0x68] sm:$0xff]
    %v76 = vld [vmem:[#allocation4 + $0x70] sm:$0xff]
    %v77 = vld [vmem:[#allocation4 + $0x78] sm:$0xff]
    %v78 = vld [vmem:[#allocation4 + $0x80] sm:$0xff]
    %v79 = vld [vmem:[#allocation4 + $0x88] sm:$0xff]
    %v80 = vld [vmem:[#allocation4 + $0x90] sm:$0xff]
    %v81 = vld [vmem:[#allocation4 + $0x98] sm:$0xff]
    %v82 = vld [vmem:[#allocation4 + $0xa0] sm:$0xff]
    %v83 = vld [vmem:[#allocation4 + $0xa8] sm:$0xff]
    %v84 = vld [vmem:[#allocation4 + $0xb0] sm:$0xff]
    %v85 = vld [vmem:[#allocation4 + $0xb8] sm:$0xff]
    %v86 = vld [vmem:[#allocation4 + $0xc0] sm:$0xff]
    %v87 = vld [vmem:[#allocation4 + $0xc8] sm:$0xff]
    %v88 = vld [vmem:[#allocation4 + $0xd0] sm:$0xff]
    %v89 = vld [vmem:[#allocation4 + $0xd8] sm:$0xff]
    %v90 = vld [vmem:[#allocation4 + $0xe0] sm:$0xff]
    %v91 = vld [vmem:[#allocation4 + $0xe8] sm:$0xff]
    %v92 = vld [vmem:[#allocation4 + $0xf0] sm:$0xff]
    %v93 = vld [vmem:[#allocation4 + $0xf8] sm:$0xff]
    %v94 = vld [vmem:[#allocation4 + $0x100] sm:$0xff]
    %v95 = vld [vmem:[#allocation4 + $0x108] sm:$0xff]
    %v96 = vld [vmem:[#allocation4 + $0x110] sm:$0xff]
    %v97 = vld [vmem:[#allocation4 + $0x118] sm:$0xff]
    %v98 = vld [vmem:[#allocation4 + $0x120] sm:$0xff]
    %v99 = vld [vmem:[#allocation4 + $0x128] sm:$0xff]
    %v100 = vld [vmem:[#allocation4 + $0x130] sm:$0xff]
    %v101 = vld [vmem:[#allocation4 + $0x138] sm:$0xff]
    %v102 = vld [vmem:[#allocation4 + $0x140] sm:$0xff]
    %v103 = vld [vmem:[#allocation4 + $0x148] sm:$0xff]
    %v104 = vld [vmem:[#allocation4 + $0x150] sm:$0xff]
    %v105 = vld [vmem:[#allocation4 + $0x158] sm:$0xff]
    %v106 = vld [vmem:[#allocation4 + $0x160] sm:$0xff]
    %v107 = vld [vmem:[#allocation4 + $0x168] sm:$0xff]
    %v108 = vld [vmem:[#allocation4 + $0x170] sm:$0xff]
    %v109 = vld [vmem:[#allocation4 + $0x178] sm:$0xff]
    %v110 = vld [vmem:[#allocation4 + $0x180] sm:$0xff]
    %v111 = vld [vmem:[#allocation4 + $0x188] sm:$0xff]
    %v112 = vld [vmem:[#allocation4 + $0x190] sm:$0xff]
    %v113 = vld [vmem:[#allocation4 + $0x198] sm:$0xff]
    %v114 = vld [vmem:[#allocation4 + $0x1a0] sm:$0xff]
    %v115 = vld [vmem:[#allocation4 + $0x1a8] sm:$0xff]
    %v116 = vld [vmem:[#allocation4 + $0x1b0] sm:$0xff]
    %v117 = vld [vmem:[#allocation4 + $0x1b8] sm:$0xff]
    %v118 = vld [vmem:[#allocation4 + $0x1c0] sm:$0xff]
    %v119 = vld [vmem:[#allocation4 + $0x1c8] sm:$0xff]
    %v120 = vld [vmem:[#allocation4 + $0x1d0] sm:$0xff]
    %v121 = vld [vmem:[#allocation4 + $0x1d8] sm:$0xff]
    %v122 = vld [vmem:[#allocation4 + $0x1e0] sm:$0xff]
    %v123 = vld [vmem:[#allocation4 + $0x1e8] sm:$0xff]
    %v124 = vld [vmem:[#allocation4 + $0x1f0] sm:$0xff]
    %v125 = vld [vmem:[#allocation4 + $0x1f8] sm:$0xff]
    %v126 = vld [vmem:[#allocation7] sm:$0xff]
    %v127 = vld [vmem:[#allocation7 + $0x8] sm:$0xff]
    %v128 = vld [vmem:[#allocation7 + $0x10] sm:$0xff]
    %v129 = vld [vmem:[#allocation7 + $0x18] sm:$0xff]
    %v130 = vld [vmem:[#allocation7 + $0x20] sm:$0xff]
    %v131 = vld [vmem:[#allocation7 + $0x28] sm:$0xff]
    %v132 = vld [vmem:[#allocation7 + $0x30] sm:$0xff]
    %v133 = vld [vmem:[#allocation7 + $0x38] sm:$0xff]
    %v134 = vld [vmem:[#allocation7 + $0x40] sm:$0xff]
    %v135 = vld [vmem:[#allocation7 + $0x48] sm:$0xff]
    %v136 = vld [vmem:[#allocation7 + $0x50] sm:$0xff]
    %v137 = vld [vmem:[#allocation7 + $0x58] sm:$0xff]
    %v138 = vld [vmem:[#allocation7 + $0x60] sm:$0xff]
    %v139 = vld [vmem:[#allocation7 + $0x68] sm:$0xff]
    %v140 = vld [vmem:[#allocation7 + $0x70] sm:$0xff]
    %v141 = vld [vmem:[#allocation7 + $0x78] sm:$0xff]
    %v142 = vld [vmem:[%s3] sm:$0x1]
    %v144 = vperm.slane %v142, 0
    %146 = vmatpush.msra.mxu0 %v141
    %147 = vmatpush.msra.mxu0 %v140
    %148 = vmatpush.msra.mxu0 %v139
    %149 = vmatpush.msra.mxu0 %v138
    %150 = vmatpush.msra.mxu0 %v137
    %151 = vmatpush.msra.mxu0 %v136
    %152 = vmatpush.msra.mxu0 %v135
    %153 = vmatpush.msra.mxu0 %v134
    %154 = vmatpush.msra.mxu0 %v133
    %155 = vmatpush.msra.mxu0 %v132
    %156 = vmatpush.msra.mxu0 %v131
    %157 = vmatpush.msra.mxu0 %v130
    %158 = vmatpush.msra.mxu0 %v129
    %159 = vmatpush.msra.mxu0 %v128
    %160 = vmatpush.msra.mxu0 %v127
    %161 = vmatpush.msra.mxu0 %v126
    %162 = vmatmul.f32.gmra.mxu0 %v62
    %v163 = vpop.f32.mrf.mxu0
    %v164 = vadd.f32 %v144, %v163
    %165 = vmatmul.f32.gmra.mxu0 %v63
    %v166 = vpop.f32.mrf.mxu0
    %v167 = vadd.f32 %v144, %v166
    %168 = vmatmul.f32.gmra.mxu0 %v64
    %v169 = vpop.f32.mrf.mxu0
    %v170 = vadd.f32 %v144, %v169
    %171 = vmatmul.f32.gmra.mxu0 %v65
    %v172 = vpop.f32.mrf.mxu0
    %v173 = vadd.f32 %v144, %v172
    %174 = vmatmul.f32.gmra.mxu0 %v66
    %v175 = vpop.f32.mrf.mxu0
    %v176 = vadd.f32 %v144, %v175
    %177 = vmatmul.f32.gmra.mxu0 %v67
    %v178 = vpop.f32.mrf.mxu0
    %v179 = vadd.f32 %v144, %v178
    %180 = vmatmul.f32.gmra.mxu0 %v68
    %v181 = vpop.f32.mrf.mxu0
    %v182 = vadd.f32 %v144, %v181
    %183 = vmatmul.f32.gmra.mxu0 %v69
    %v184 = vpop.f32.mrf.mxu0
    %v185 = vadd.f32 %v144, %v184
    %186 = vmatmul.f32.gmra.mxu0 %v70
    %v187 = vpop.f32.mrf.mxu0
    %v188 = vadd.f32 %v144, %v187
    %189 = vmatmul.f32.gmra.mxu0 %v71
    %v190 = vpop.f32.mrf.mxu0
    %v191 = vadd.f32 %v144, %v190
    %192 = vmatmul.f32.gmra.mxu0 %v72
    %v193 = vpop.f32.mrf.mxu0
    %v194 = vadd.f32 %v144, %v193
    %195 = vmatmul.f32.gmra.mxu0 %v73
    %v196 = vpop.f32.mrf.mxu0
    %v197 = vadd.f32 %v144, %v196
    %198 = vmatmul.f32.gmra.mxu0 %v74
    %v199 = vpop.f32.mrf.mxu0
    %v200 = vadd.f32 %v144, %v199
    %201 = vmatmul.f32.gmra.mxu0 %v75
    %v202 = vpop.f32.mrf.mxu0
    %v203 = vadd.f32 %v144, %v202
    %204 = vmatmul.f32.gmra.mxu0 %v76
    %v205 = vpop.f32.mrf.mxu0
    %v206 = vadd.f32 %v144, %v205
    %207 = vmatmul.f32.gmra.mxu0 %v77
    %v208 = vpop.f32.mrf.mxu0
    %v209 = vadd.f32 %v144, %v208
    %210 = vmatmul.f32.gmra.mxu0 %v78
    %v211 = vpop.f32.mrf.mxu0
    %v212 = vadd.f32 %v144, %v211
    %213 = vmatmul.f32.gmra.mxu0 %v79
    %v214 = vpop.f32.mrf.mxu0
    %v215 = vadd.f32 %v144, %v214
    %216 = vmatmul.f32.gmra.mxu0 %v80
    %v217 = vpop.f32.mrf.mxu0
    %v218 = vadd.f32 %v144, %v217
    %219 = vmatmul.f32.gmra.mxu0 %v81
    %v220 = vpop.f32.mrf.mxu0
    %v221 = vadd.f32 %v144, %v220
    %222 = vmatmul.f32.gmra.mxu0 %v82
    %v223 = vpop.f32.mrf.mxu0
    %v224 = vadd.f32 %v144, %v223
    %225 = vmatmul.f32.gmra.mxu0 %v83
    %v226 = vpop.f32.mrf.mxu0
    %v227 = vadd.f32 %v144, %v226
    %228 = vmatmul.f32.gmra.mxu0 %v84
    %v229 = vpop.f32.mrf.mxu0
    %v230 = vadd.f32 %v144, %v229
    %231 = vmatmul.f32.gmra.mxu0 %v85
    %v232 = vpop.f32.mrf.mxu0
    %v233 = vadd.f32 %v144, %v232
    %234 = vmatmul.f32.gmra.mxu0 %v86
    %v235 = vpop.f32.mrf.mxu0
    %v236 = vadd.f32 %v144, %v235
    %237 = vmatmul.f32.gmra.mxu0 %v87
    %v238 = vpop.f32.mrf.mxu0
    %v239 = vadd.f32 %v144, %v238
    %240 = vmatmul.f32.gmra.mxu0 %v88
    %v241 = vpop.f32.mrf.mxu0
    %v242 = vadd.f32 %v144, %v241
    %243 = vmatmul.f32.gmra.mxu0 %v89
    %v244 = vpop.f32.mrf.mxu0
    %v245 = vadd.f32 %v144, %v244
    %246 = vmatmul.f32.gmra.mxu0 %v90
    %v247 = vpop.f32.mrf.mxu0
    %v248 = vadd.f32 %v144, %v247
    %249 = vmatmul.f32.gmra.mxu0 %v91
    %v250 = vpop.f32.mrf.mxu0
    %v251 = vadd.f32 %v144, %v250
    %252 = vmatmul.f32.gmra.mxu0 %v92
    %v253 = vpop.f32.mrf.mxu0
    %v254 = vadd.f32 %v144, %v253
    %255 = vmatmul.f32.gmra.mxu0 %v93
    %v256 = vpop.f32.mrf.mxu0
    %v257 = vadd.f32 %v144, %v256
    %258 = vmatmul.f32.gmra.mxu0 %v94
    %v259 = vpop.f32.mrf.mxu0
    %v260 = vadd.f32 %v144, %v259
    %261 = vmatmul.f32.gmra.mxu0 %v95
    %v262 = vpop.f32.mrf.mxu0
    %v263 = vadd.f32 %v144, %v262
    %264 = vmatmul.f32.gmra.mxu0 %v96
    %v265 = vpop.f32.mrf.mxu0
    %v266 = vadd.f32 %v144, %v265
    %267 = vmatmul.f32.gmra.mxu0 %v97
    %v268 = vpop.f32.mrf.mxu0
    %v269 = vadd.f32 %v144, %v268
    %270 = vmatmul.f32.gmra.mxu0 %v98
    %v271 = vpop.f32.mrf.mxu0
    %v272 = vadd.f32 %v144, %v271
    %273 = vmatmul.f32.gmra.mxu0 %v99
    %v274 = vpop.f32.mrf.mxu0
    %v275 = vadd.f32 %v144, %v274
    %276 = vmatmul.f32.gmra.mxu0 %v100
    %v277 = vpop.f32.mrf.mxu0
    %v278 = vadd.f32 %v144, %v277
    %279 = vmatmul.f32.gmra.mxu0 %v101
    %v280 = vpop.f32.mrf.mxu0
    %v281 = vadd.f32 %v144, %v280
    %282 = vmatmul.f32.gmra.mxu0 %v102
    %v283 = vpop.f32.mrf.mxu0
    %v284 = vadd.f32 %v144, %v283
    %285 = vmatmul.f32.gmra.mxu0 %v103
    %v286 = vpop.f32.mrf.mxu0
    %v287 = vadd.f32 %v144, %v286
    %288 = vmatmul.f32.gmra.mxu0 %v104
    %v289 = vpop.f32.mrf.mxu0
    %v290 = vadd.f32 %v144, %v289
    %291 = vmatmul.f32.gmra.mxu0 %v105
    %v292 = vpop.f32.mrf.mxu0
    %v293 = vadd.f32 %v144, %v292
    %294 = vmatmul.f32.gmra.mxu0 %v106
    %v295 = vpop.f32.mrf.mxu0
    %v296 = vadd.f32 %v144, %v295
    %297 = vmatmul.f32.gmra.mxu0 %v107
    %v298 = vpop.f32.mrf.mxu0
    %v299 = vadd.f32 %v144, %v298
    %300 = vmatmul.f32.gmra.mxu0 %v108
    %v301 = vpop.f32.mrf.mxu0
    %v302 = vadd.f32 %v144, %v301
    %303 = vmatmul.f32.gmra.mxu0 %v109
    %v304 = vpop.f32.mrf.mxu0
    %v305 = vadd.f32 %v144, %v304
    %306 = vmatmul.f32.gmra.mxu0 %v110
    %v307 = vpop.f32.mrf.mxu0
    %v308 = vadd.f32 %v144, %v307
    %309 = vmatmul.f32.gmra.mxu0 %v111
    %v310 = vpop.f32.mrf.mxu0
    %v311 = vadd.f32 %v144, %v310
    %312 = vmatmul.f32.gmra.mxu0 %v112
    %v313 = vpop.f32.mrf.mxu0
    %v314 = vadd.f32 %v144, %v313
    %315 = vmatmul.f32.gmra.mxu0 %v113
    %v316 = vpop.f32.mrf.mxu0
    %v317 = vadd.f32 %v144, %v316
    %318 = vmatmul.f32.gmra.mxu0 %v114
    %v319 = vpop.f32.mrf.mxu0
    %v320 = vadd.f32 %v144, %v319
    %321 = vmatmul.f32.gmra.mxu0 %v115
    %v322 = vpop.f32.mrf.mxu0
    %v323 = vadd.f32 %v144, %v322
    %324 = vmatmul.f32.gmra.mxu0 %v116
    %v325 = vpop.f32.mrf.mxu0
    %v326 = vadd.f32 %v144, %v325
    %327 = vmatmul.f32.gmra.mxu0 %v117
    %v328 = vpop.f32.mrf.mxu0
    %v329 = vadd.f32 %v144, %v328
    %330 = vmatmul.f32.gmra.mxu0 %v118
    %v331 = vpop.f32.mrf.mxu0
    %v332 = vadd.f32 %v144, %v331
    %333 = vmatmul.f32.gmra.mxu0 %v119
    %v334 = vpop.f32.mrf.mxu0
    %v335 = vadd.f32 %v144, %v334
    %336 = vmatmul.f32.gmra.mxu0 %v120
    %v337 = vpop.f32.mrf.mxu0
    %v338 = vadd.f32 %v144, %v337
    %339 = vmatmul.f32.gmra.mxu0 %v121
    %v340 = vpop.f32.mrf.mxu0
    %v341 = vadd.f32 %v144, %v340
    %342 = vmatmul.f32.gmra.mxu0 %v122
    %v343 = vpop.f32.mrf.mxu0
    %v344 = vadd.f32 %v144, %v343
    %345 = vmatmul.f32.gmra.mxu0 %v123
    %v346 = vpop.f32.mrf.mxu0
    %v347 = vadd.f32 %v144, %v346
    %348 = vmatmul.f32.gmra.mxu0 %v124
    %v349 = vpop.f32.mrf.mxu0
    %v350 = vadd.f32 %v144, %v349
    %351 = vmatmul.f32.gmra.mxu0 %v125
    %v352 = vpop.f32.mrf.mxu0
    %v353 = vadd.f32 %v144, %v352
    %354 = vdwg.mxu0
    %v355 = vsub.f32 %v164, %v62
    %v356 = vsub.f32 %v167, %v63
    %v357 = vsub.f32 %v170, %v64
    %v358 = vsub.f32 %v173, %v65
    %v359 = vsub.f32 %v176, %v66
    %v360 = vsub.f32 %v179, %v67
    %v361 = vsub.f32 %v182, %v68
    %v362 = vsub.f32 %v185, %v69
    %v363 = vsub.f32 %v188, %v70
    %v364 = vsub.f32 %v191, %v71
    %v365 = vsub.f32 %v194, %v72
    %v366 = vsub.f32 %v197, %v73
    %v367 = vsub.f32 %v200, %v74
    %v368 = vsub.f32 %v203, %v75
    %v369 = vsub.f32 %v206, %v76
    %v370 = vsub.f32 %v209, %v77
    %v371 = vsub.f32 %v212, %v78
    %v372 = vsub.f32 %v215, %v79
    %v373 = vsub.f32 %v218, %v80
    %v374 = vsub.f32 %v221, %v81
    %v375 = vsub.f32 %v224, %v82
    %v376 = vsub.f32 %v227, %v83
    %v377 = vsub.f32 %v230, %v84
    %v378 = vsub.f32 %v233, %v85
    %v379 = vsub.f32 %v236, %v86
    %v380 = vsub.f32 %v239, %v87
    %v381 = vsub.f32 %v242, %v88
    %v382 = vsub.f32 %v245, %v89
    %v383 = vsub.f32 %v248, %v90
    %v384 = vsub.f32 %v251, %v91
    %v385 = vsub.f32 %v254, %v92
    %v386 = vsub.f32 %v257, %v93
    %v387 = vsub.f32 %v260, %v94
    %v388 = vsub.f32 %v263, %v95
    %v389 = vsub.f32 %v266, %v96
    %v390 = vsub.f32 %v269, %v97
    %v391 = vsub.f32 %v272, %v98
    %v392 = vsub.f32 %v275, %v99
    %v393 = vsub.f32 %v278, %v100
    %v394 = vsub.f32 %v281, %v101
    %v395 = vsub.f32 %v284, %v102
    %v396 = vsub.f32 %v287, %v103
    %v397 = vsub.f32 %v290, %v104
    %v398 = vsub.f32 %v293, %v105
    %v399 = vsub.f32 %v296, %v106
    %v400 = vsub.f32 %v299, %v107
    %v401 = vsub.f32 %v302, %v108
    %v402 = vsub.f32 %v305, %v109
    %v403 = vsub.f32 %v308, %v110
    %v404 = vsub.f32 %v311, %v111
    %v405 = vsub.f32 %v314, %v112
    %v406 = vsub.f32 %v317, %v113
    %v407 = vsub.f32 %v320, %v114
    %v408 = vsub.f32 %v323, %v115
    %v409 = vsub.f32 %v326, %v116
    %v410 = vsub.f32 %v329, %v117
    %v411 = vsub.f32 %v332, %v118
    %v412 = vsub.f32 %v335, %v119
    %v413 = vsub.f32 %v338, %v120
    %v414 = vsub.f32 %v341, %v121
    %v415 = vsub.f32 %v344, %v122
    %v416 = vsub.f32 %v347, %v123
    %v417 = vsub.f32 %v350, %v124
    %v418 = vsub.f32 %v353, %v125
    %v419 = vmul.f32 %v355, %v355
    %v420 = vmul.f32 %v356, %v356
    %v421 = vmul.f32 %v357, %v357
    %v422 = vmul.f32 %v358, %v358
    %v423 = vmul.f32 %v359, %v359
    %v424 = vmul.f32 %v360, %v360
    %v425 = vmul.f32 %v361, %v361
    %v426 = vmul.f32 %v362, %v362
    %v427 = vmul.f32 %v363, %v363
    %v428 = vmul.f32 %v364, %v364
    %v429 = vmul.f32 %v365, %v365
    %v430 = vmul.f32 %v366, %v366
    %v431 = vmul.f32 %v367, %v367
    %v432 = vmul.f32 %v368, %v368
    %v433 = vmul.f32 %v369, %v369
    %v434 = vmul.f32 %v370, %v370
    %v435 = vmul.f32 %v371, %v371
    %v436 = vmul.f32 %v372, %v372
    %v437 = vmul.f32 %v373, %v373
    %v438 = vmul.f32 %v374, %v374
    %v439 = vmul.f32 %v375, %v375
    %v440 = vmul.f32 %v376, %v376
    %v441 = vmul.f32 %v377, %v377
    %v442 = vmul.f32 %v378, %v378
    %v443 = vmul.f32 %v379, %v379
    %v444 = vmul.f32 %v380, %v380
    %v445 = vmul.f32 %v381, %v381
    %v446 = vmul.f32 %v382, %v382
    %v447 = vmul.f32 %v383, %v383
    %v448 = vmul.f32 %v384, %v384
    %v449 = vmul.f32 %v385, %v385
    %v450 = vmul.f32 %v386, %v386
    %v451 = vmul.f32 %v387, %v387
    %v452 = vmul.f32 %v388, %v388
    %v453 = vmul.f32 %v389, %v389
    %v454 = vmul.f32 %v390, %v390
    %v455 = vmul.f32 %v391, %v391
    %v456 = vmul.f32 %v392, %v392
    %v457 = vmul.f32 %v393, %v393
    %v458 = vmul.f32 %v394, %v394
    %v459 = vmul.f32 %v395, %v395
    %v460 = vmul.f32 %v396, %v396
    %v461 = vmul.f32 %v397, %v397
    %v462 = vmul.f32 %v398, %v398
    %v463 = vmul.f32 %v399, %v399
    %v464 = vmul.f32 %v400, %v400
    %v465 = vmul.f32 %v401, %v401
    %v466 = vmul.f32 %v402, %v402
    %v467 = vmul.f32 %v403, %v403
    %v468 = vmul.f32 %v404, %v404
    %v469 = vmul.f32 %v405, %v405
    %v470 = vmul.f32 %v406, %v406
    %v471 = vmul.f32 %v407, %v407
    %v472 = vmul.f32 %v408, %v408
    %v473 = vmul.f32 %v409, %v409
    %v474 = vmul.f32 %v410, %v410
    %v475 = vmul.f32 %v411, %v411
    %v476 = vmul.f32 %v412, %v412
    %v477 = vmul.f32 %v413, %v413
    %v478 = vmul.f32 %v414, %v414
    %v479 = vmul.f32 %v415, %v415
    %v480 = vmul.f32 %v416, %v416
    %v481 = vmul.f32 %v417, %v417
    %v482 = vmul.f32 %v418, %v418
    %s483 = sld [smem:[#allocation3]]
    %v484 = vstv %s483
    %v485 = vsub.f32 %v419, %v484
    %v486 = vsub.f32 %v420, %v484
    %v487 = vsub.f32 %v421, %v484
    %v488 = vsub.f32 %v422, %v484
    %v489 = vsub.f32 %v423, %v484
    %v490 = vsub.f32 %v424, %v484
    %v491 = vsub.f32 %v425, %v484
    %v492 = vsub.f32 %v426, %v484
    %v493 = vsub.f32 %v427, %v484
    %v494 = vsub.f32 %v428, %v484
    %v495 = vsub.f32 %v429, %v484
    %v496 = vsub.f32 %v430, %v484
    %v497 = vsub.f32 %v431, %v484
    %v498 = vsub.f32 %v432, %v484
    %v499 = vsub.f32 %v433, %v484
    %v500 = vsub.f32 %v434, %v484
    %v501 = vsub.f32 %v435, %v484
    %v502 = vsub.f32 %v436, %v484
    %v503 = vsub.f32 %v437, %v484
    %v504 = vsub.f32 %v438, %v484
    %v505 = vsub.f32 %v439, %v484
    %v506 = vsub.f32 %v440, %v484
    %v507 = vsub.f32 %v441, %v484
    %v508 = vsub.f32 %v442, %v484
    %v509 = vsub.f32 %v443, %v484
    %v510 = vsub.f32 %v444, %v484
    %v511 = vsub.f32 %v445, %v484
    %v512 = vsub.f32 %v446, %v484
    %v513 = vsub.f32 %v447, %v484
    %v514 = vsub.f32 %v448, %v484
    %v515 = vsub.f32 %v449, %v484
    %v516 = vsub.f32 %v450, %v484
    %v517 = vsub.f32 %v451, %v484
    %v518 = vsub.f32 %v452, %v484
    %v519 = vsub.f32 %v453, %v484
    %v520 = vsub.f32 %v454, %v484
    %v521 = vsub.f32 %v455, %v484
    %v522 = vsub.f32 %v456, %v484
    %v523 = vsub.f32 %v457, %v484
    %v524 = vsub.f32 %v458, %v484
    %v525 = vsub.f32 %v459, %v484
    %v526 = vsub.f32 %v460, %v484
    %v527 = vsub.f32 %v461, %v484
    %v528 = vsub.f32 %v462, %v484
    %v529 = vsub.f32 %v463, %v484
    %v530 = vsub.f32 %v464, %v484
    %v531 = vsub.f32 %v465, %v484
    %v532 = vsub.f32 %v466, %v484
    %v533 = vsub.f32 %v467, %v484
    %v534 = vsub.f32 %v468, %v484
    %v535 = vsub.f32 %v469, %v484
    %v536 = vsub.f32 %v470, %v484
    %v537 = vsub.f32 %v471, %v484
    %v538 = vsub.f32 %v472, %v484
    %v539 = vsub.f32 %v473, %v484
    %v540 = vsub.f32 %v474, %v484
    %v541 = vsub.f32 %v475, %v484
    %v542 = vsub.f32 %v476, %v484
    %v543 = vsub.f32 %v477, %v484
    %v544 = vsub.f32 %v478, %v484
    %v545 = vsub.f32 %v479, %v484
    %v546 = vsub.f32 %v480, %v484
    %v547 = vsub.f32 %v481, %v484
    %v548 = vsub.f32 %v482, %v484
    %v549 = vmax.f32 %v485, 0.0
    %v550 = vmax.f32 %v486, 0.0
    %v551 = vmax.f32 %v487, 0.0
    %v552 = vmax.f32 %v488, 0.0
    %v553 = vmax.f32 %v489, 0.0
    %v554 = vmax.f32 %v490, 0.0
    %v555 = vmax.f32 %v491, 0.0
    %v556 = vmax.f32 %v492, 0.0
    %v557 = vmax.f32 %v493, 0.0
    %v558 = vmax.f32 %v494, 0.0
    %v559 = vmax.f32 %v495, 0.0
    %v560 = vmax.f32 %v496, 0.0
    %v561 = vmax.f32 %v497, 0.0
    %v562 = vmax.f32 %v498, 0.0
    %v563 = vmax.f32 %v499, 0.0
    %v564 = vmax.f32 %v500, 0.0
    %v565 = vmax.f32 %v501, 0.0
    %v566 = vmax.f32 %v502, 0.0
    %v567 = vmax.f32 %v503, 0.0
    %v568 = vmax.f32 %v504, 0.0
    %v569 = vmax.f32 %v505, 0.0
    %v570 = vmax.f32 %v506, 0.0
    %v571 = vmax.f32 %v507, 0.0
    %v572 = vmax.f32 %v508, 0.0
    %v573 = vmax.f32 %v509, 0.0
    %v574 = vmax.f32 %v510, 0.0
    %v575 = vmax.f32 %v511, 0.0
    %v576 = vmax.f32 %v512, 0.0
    %v577 = vmax.f32 %v513, 0.0
    %v578 = vmax.f32 %v514, 0.0
    %v579 = vmax.f32 %v515, 0.0
    %v580 = vmax.f32 %v516, 0.0
    %v581 = vmax.f32 %v517, 0.0
    %v582 = vmax.f32 %v518, 0.0
    %v583 = vmax.f32 %v519, 0.0
    %v584 = vmax.f32 %v520, 0.0
    %v585 = vmax.f32 %v521, 0.0
    %v586 = vmax.f32 %v522, 0.0
    %v587 = vmax.f32 %v523, 0.0
    %v588 = vmax.f32 %v524, 0.0
    %v589 = vmax.f32 %v525, 0.0
    %v590 = vmax.f32 %v526, 0.0
    %v591 = vmax.f32 %v527, 0.0
    %v592 = vmax.f32 %v528, 0.0
    %v593 = vmax.f32 %v529, 0.0
    %v594 = vmax.f32 %v530, 0.0
    %v595 = vmax.f32 %v531, 0.0
    %v596 = vmax.f32 %v532, 0.0
    %v597 = vmax.f32 %v533, 0.0
    %v598 = vmax.f32 %v534, 0.0
    %v599 = vmax.f32 %v535, 0.0
    %v600 = vmax.f32 %v536, 0.0
    %v601 = vmax.f32 %v537, 0.0
    %v602 = vmax.f32 %v538, 0.0
    %v603 = vmax.f32 %v539, 0.0
    %v604 = vmax.f32 %v540, 0.0
    %v605 = vmax.f32 %v541, 0.0
    %v606 = vmax.f32 %v542, 0.0
    %v607 = vmax.f32 %v543, 0.0
    %v608 = vmax.f32 %v544, 0.0
    %v609 = vmax.f32 %v545, 0.0
    %v610 = vmax.f32 %v546, 0.0
    %v611 = vmax.f32 %v547, 0.0
    %v612 = vmax.f32 %v548, 0.0
    %v613 = vld [vmem:[#allocation2] sm:$0xff]
    %v614 = vadd.f32 %v549, %v550
    %v615 = vadd.f32 %v614, %v551
    %v616 = vadd.f32 %v615, %v552
    %v617 = vadd.f32 %v616, %v553
    %v618 = vadd.f32 %v617, %v554
    %v619 = vadd.f32 %v618, %v555
    %v620 = vadd.f32 %v619, %v556
    %v621 = vadd.f32 %v620, %v557
    %v622 = vadd.f32 %v621, %v558
    %v623 = vadd.f32 %v622, %v559
    %v624 = vadd.f32 %v623, %v560
    %v625 = vadd.f32 %v624, %v561
    %v626 = vadd.f32 %v625, %v562
    %v627 = vadd.f32 %v626, %v563
    %v628 = vadd.f32 %v627, %v564
    %v629 = vadd.f32 %v628, %v565
    %v630 = vadd.f32 %v629, %v566
    %v631 = vadd.f32 %v630, %v567
    %v632 = vadd.f32 %v631, %v568
    %v633 = vadd.f32 %v632, %v569
    %v634 = vadd.f32 %v633, %v570
    %v635 = vadd.f32 %v634, %v571
    %v636 = vadd.f32 %v635, %v572
    %v637 = vadd.f32 %v636, %v573
    %v638 = vadd.f32 %v637, %v574
    %v639 = vadd.f32 %v638, %v575
    %v640 = vadd.f32 %v639, %v576
    %v641 = vadd.f32 %v640, %v577
    %v642 = vadd.f32 %v641, %v578
    %v643 = vadd.f32 %v642, %v579
    %v644 = vadd.f32 %v643, %v580
    %v645 = vadd.f32 %v644, %v581
    %v646 = vadd.f32 %v645, %v582
    %v647 = vadd.f32 %v646, %v583
    %v648 = vadd.f32 %v647, %v584
    %v649 = vadd.f32 %v648, %v585
    %v650 = vadd.f32 %v649, %v586
    %v651 = vadd.f32 %v650, %v587
    %v652 = vadd.f32 %v651, %v588
    %v653 = vadd.f32 %v652, %v589
    %v654 = vadd.f32 %v653, %v590
    %v655 = vadd.f32 %v654, %v591
    %v656 = vadd.f32 %v655, %v592
    %v657 = vadd.f32 %v656, %v593
    %v658 = vadd.f32 %v657, %v594
    %v659 = vadd.f32 %v658, %v595
    %v660 = vadd.f32 %v659, %v596
    %v661 = vadd.f32 %v660, %v597
    %v662 = vadd.f32 %v661, %v598
    %v663 = vadd.f32 %v662, %v599
    %v664 = vadd.f32 %v663, %v600
    %v665 = vadd.f32 %v664, %v601
    %v666 = vadd.f32 %v665, %v602
    %v667 = vadd.f32 %v666, %v603
    %v668 = vadd.f32 %v667, %v604
    %v669 = vadd.f32 %v668, %v605
    %v670 = vadd.f32 %v669, %v606
    %v671 = vadd.f32 %v670, %v607
    %v672 = vadd.f32 %v671, %v608
    %v673 = vadd.f32 %v672, %v609
    %v674 = vadd.f32 %v673, %v610
    %v675 = vadd.f32 %v674, %v611
    %v676 = vadd.f32 %v675, %v612
    %v677 = vadd.f32 %v613, %v676
    %678 = vst [vmem:[#allocation2] sm:$0xff] %v677
    // Predicated region
    $region30: #{tpu_custom_call.1} parent=1 // pred_check
      %p679 = pneg %p57
    $region31: #{tpu_custom_call.1} parent=1 // pred_check_branch
      %681 = sbr.rel (%p679) target = $region33
    $region32: #{tpu_custom_call.1} parent=1 // pred_region
      %v682 = vld [vmem:[#allocation2] sm:$0xff]
      %683 = vadd.xlane.f32.xlu0 %v682
      %v684 = vpop.xlane.xlu0 %683
      %v685 = vrot.slane %v684, 4
      %v686 = vadd.f32 %v684, %v685
      %v687 = vrot.slane %v686, 2
      %v688 = vadd.f32 %v686, %v687
      %v689 = vrot.slane %v688, 1
      %v690 = vadd.f32 %v688, %v689
      %s691 = vtos %v690
      %v692 = vstv %s691
      %693 = vst [vmem:[#allocation9] sm:$0xff] %v692
    $region33: #{tpu_custom_call.1} parent=1 // pred_fallthru
      _
    // Predicated region
    $region34: #{tpu_custom_call.1} parent=1 // pred_check
      _
    $region35: #{tpu_custom_call.1} parent=1 // pred_check_branch
      %695 = sbr.rel (0) target = $region37
    $region36: #{tpu_custom_call.1} parent=1 // pred_region
      %697 = vsyncadd [#allocation6], 0
      %s699 = sshll.u32 [#allocation9], 4
      %s700 = int_to_ptr.vmem [resolvable:$true] %s699
      %s701 = sshll.u32 %s4, 4
      %s702 = int_to_ptr.hbm [resolvable:$true] %s701
      %704 = dma.vmem_to_hbm [thread:$0]  %s700, 128, %s702, [#allocation6]
    $region37: #{tpu_custom_call.1} parent=1 // pred_fallthru
      _
    // Predicated region
    $region38: #{tpu_custom_call.1} parent=1 // pred_check
      _
    $region39: #{tpu_custom_call.1} parent=1 // pred_check_branch
      %706 = sbr.rel (0) target = $region41
    $region40: #{tpu_custom_call.1} parent=1 // pred_region
      %708 = dma.done [#allocation6], 128
    $region41: #{tpu_custom_call.1} parent=1 // pred_fallthru
      _
    %709 = vsyncpa [#allocation5], 1
    %710 = vsyncpa [#allocation8], 1
    %711 = vsyncpa [#allocation6], 1

</llo_original>
